<compile_context>
chip_gen: v7x
topology: tpu7x:2x2x1
jax: 0.10.0
libtpu: 0.0.40
codegen_flags: <defaults>
</compile_context>

<pallas_src>
import jax
import jax.numpy as jnp
from jax import lax
from jax.experimental import pallas as pl
from jax.experimental.pallas import tpu as pltpu


def _round_up(x, m):
    return ((x + m - 1) // m) * m


_NEG_CAP = -1e30  # "-inf" stand-in that keeps (x - x) == 0 exact (no NaN on all-masked rows)


def _make_kernel(true_b, tb, rc):
    """Kernel over a tb-row batch tile, processed rc rows (one sublane group) at a time."""
    n_chunks = tb // rc

    def kernel(anc_ref, pos_ref, neg_ref, mpos_ref, mneg_ref, o_ref):
        pid = pl.program_id(0)
        neg_cap = jnp.float32(_NEG_CAP)

        def body(i, carry):
            r0 = pl.multiple_of(i * rc, rc)

            a = anc_ref[pl.ds(r0, rc), :].astype(jnp.float32)        # (rc, D), 1/T folded
            p = pos_ref[pl.ds(r0, rc), :, :].astype(jnp.float32)     # (rc, P, D)
            n = neg_ref[pl.ds(r0, rc), :, :].astype(jnp.float32)     # (rc, N, D)
            mp = mpos_ref[pl.ds(r0, rc), :]                          # (rc, P)
            mn = mneg_ref[pl.ds(r0, rc), :]                          # (rc, N)

            # Per-row anchor . item dot products contracting D: broadcast
            # multiply + lane reduce (VPU + XLU); temporaries are chunk-sized.
            sp = jnp.sum(a[:, None, :] * p, axis=-1)                 # (rc, P)
            sn = jnp.sum(a[:, None, :] * n, axis=-1)                 # (rc, N)

            # Mask invalid slots BEFORE the max so the stabilisation tracks
            # only valid logits; all exponents end up <= 0 (no overflow).
            sp = jnp.where(mp > 0, sp, neg_cap)
            sn = jnp.where(mn > 0, sn, neg_cap)
            m = jnp.maximum(jnp.max(sp, axis=-1, keepdims=True),
                            jnp.max(sn, axis=-1, keepdims=True))     # (rc, 1)

            # The exp(-m) factor cancels exactly in pos_v / (pos_v + neg_v).
            pos_num = jnp.sum(jnp.exp(sp - m) * mp, axis=-1, keepdims=True)
            neg_num = jnp.sum(jnp.exp(sn - m) * mn, axis=-1, keepdims=True)
            pos_den = jnp.sum(mp, axis=-1, keepdims=True)
            neg_den = jnp.sum(mn, axis=-1, keepdims=True)

            pos_v = pos_num / jnp.where(pos_den > 0, pos_den, 1.0)
            neg_v = neg_num / jnp.where(neg_den > 0, neg_den, 1.0)
            term = -jnp.log(pos_v / (pos_v + neg_v))                  # (rc, 1)

            # Zero batch-padding / tile-tail rows so the wrapper can simply sum.
            rows = pid * tb + r0 + lax.broadcasted_iota(jnp.int32, (rc, 1), 0)
            o_ref[pl.ds(r0, rc), :] = jnp.where(rows < true_b, term, jnp.float32(0.0))
            return carry

        lax.fori_loop(0, n_chunks, body, 0)

    return kernel


def soft_nearest_neighbours_loss(anchor, positives, negatives,
                                 mask_pos=None, mask_neg=None,
                                 temperature=1.0, metric="dot"):
    """Forward pass of SoftNearestNeighboursLoss ('dot' metric).

    anchor: (B, D); positives: (B, P, D); negatives: (B, N, D).
    """
    if metric != "dot":
        # TODO(synk): 'distance' and 'cosine' metrics are not implemented.
        raise NotImplementedError("only metric='dot' is implemented")

    anchor = jnp.asarray(anchor)
    positives = jnp.asarray(positives)
    negatives = jnp.asarray(negatives)
    if anchor.ndim == 1:                        # un-batched call, as in the PyTorch module
        anchor, positives, negatives = anchor[None], positives[None], negatives[None]

    B, D = anchor.shape
    _, P, _ = positives.shape
    _, N, _ = negatives.shape

    # Dominant streams keep their storage dtype (bf16 stays bf16 in HBM -> half
    # the read); anything exotic falls back to f32.  Math is f32 in-kernel.
    def _as_stream(x):
        ok = (jnp.dtype(jnp.float32), jnp.dtype(jnp.bfloat16))
        return x if x.dtype in ok else x.astype(jnp.float32)
    positives = _as_stream(positives)
    negatives = _as_stream(negatives)

    mask_pos = (jnp.ones((B, P), jnp.float32) if mask_pos is None
                else jnp.asarray(mask_pos, jnp.float32))
    mask_neg = (jnp.ones((B, N), jnp.float32) if mask_neg is None
                else jnp.asarray(mask_neg, jnp.float32))

    # Fold 1/T into the tiny anchor stream (exactly equivalent for 'dot').
    inv_t = jnp.float32(1.0) / jnp.asarray(temperature, jnp.float32).reshape(())
    anchor = anchor.astype(jnp.float32) * inv_t

    # Only pad the batch to the sublane granule when it is unaligned (tiny, and
    # a no-op for the common 8-aligned batch).  Tile tails that do not divide
    # the batch are left to Pallas partial blocks (no full pad pass).
    B8 = _round_up(B, 8)
    if B8 != B:
        bpad = (0, B8 - B)
        anchor = jnp.pad(anchor, (bpad, (0, 0)))
        positives = jnp.pad(positives, (bpad, (0, 0), (0, 0)))
        negatives = jnp.pad(negatives, (bpad, (0, 0), (0, 0)))
        mask_pos = jnp.pad(mask_pos, (bpad, (0, 0)))
        mask_neg = jnp.pad(mask_neg, (bpad, (0, 0)))

    # Generation-aware tile sizing: ~40 MiB scoped VMEM on v7x (64 MiB / TC),
    # ~80 MiB on v5e / v6e (128 MiB); the Pallas pipeline double-buffers.
    try:
        vmem_cap = int(pltpu.get_tpu_info().vmem_capacity_bytes)
    except Exception:
        vmem_cap = 64 * 1024 * 1024                 # v7x-sized fallback: safe everywhere
    vmem_limit = min(max((vmem_cap * 5) // 8, 32 * 1024 * 1024), 96 * 1024 * 1024)
    stream_budget = vmem_limit - 6 * 1024 * 1024    # headroom for scratch / temporaries

    pos_item = jnp.dtype(positives.dtype).itemsize
    neg_item = jnp.dtype(negatives.dtype).itemsize
    bytes_per_row = P * D * pos_item + N * D * neg_item + D * 4 + (P + N) * 4 + 4
    tb = stream_budget // (2 * bytes_per_row)       # x2: double buffering
    tb = min(tb, 4096, B8)
    if B8 >= 16:
        tb = min(tb, B8 // 2)                       # keep >=2 grid steps for v7x's 2 TCs
    tb = max(8, (tb // 8) * 8)
    grid = (pl.cdiv(B8, tb),)

    per_row = pl.pallas_call(
        _make_kernel(B, tb, rc=8),
        out_shape=jax.ShapeDtypeStruct((B8, 1), jnp.float32),
        grid_spec=pltpu.PrefetchScalarGridSpec(
            num_scalar_prefetch=0,
            grid=grid,
            in_specs=[
                pl.BlockSpec((tb, D), lambda b: (b, 0)),         # anchor (1/T folded)
                pl.BlockSpec((tb, P, D), lambda b: (b, 0, 0)),   # positives
                pl.BlockSpec((tb, N, D), lambda b: (b, 0, 0)),   # negatives
                pl.BlockSpec((tb, P), lambda b: (b, 0)),         # positive mask
                pl.BlockSpec((tb, N), lambda b: (b, 0)),         # negative mask
            ],
            out_specs=pl.BlockSpec((tb, 1), lambda b: (b, 0)),   # per-row loss terms
        ),
        compiler_params=pltpu.CompilerParams(
            dimension_semantics=("parallel",),
            vmem_limit_bytes=int(vmem_limit),
        ),
    )(anchor, positives, negatives, mask_pos, mask_neg)

    # Tiny final reduction (B values) stays in XLA.
    return jnp.sum(per_row) / jnp.float32(B)


def _reference_loss(anchor, positives, negatives,
                    mask_pos=None, mask_neg=None, T=1.0):
    """Pure-JAX transcription of the PyTorch forward ('dot' metric)."""
    B, P, _ = positives.shape
    N = negatives.shape[1]
    if mask_pos is None:
        mask_pos = jnp.ones((B, P), jnp.float32)
    if mask_neg is None:
        mask_neg = jnp.ones((B, N), jnp.float32)
    a = anchor[:, None, :]
    pos = jnp.einsum('bod,bpd->bp', a, positives) / T
    neg = jnp.einsum('bod,bnd->bn', a, negatives) / T
    pos = jnp.sum(jnp.exp(pos) * mask_pos, axis=-1) / mask_pos.sum(-1)
    neg = jnp.sum(jnp.exp(neg) * mask_neg, axis=-1) / mask_neg.sum(-1)
    return -jnp.sum(jnp.log(pos / (pos + neg))) / B


if __name__ == "__main__":
    key = jax.random.PRNGKey(0)
    k1, k2, k3, k4, k5, k6 = jax.random.split(key, 6)

    # 1) small case, default (all-ones) masks
    B, P, N, D = 2, 8, 8, 32
    anchor = jax.random.normal(k1, (B, D), jnp.float32) * 0.1
    positives = jax.random.normal(k2, (B, P, D), jnp.float32) * 0.1
    negatives = jax.random.normal(k3, (B, N, D), jnp.float32) * 0.1
    temperature = 1.0   # matches nn.Parameter(Tensor([1]))

    loss = soft_nearest_neighbours_loss(anchor, positives, negatives,
                                        temperature=temperature)
    jax.block_until_ready(loss)
    ref = _reference_loss(anchor, positives, negatives, T=temperature)
    assert jnp.allclose(loss, ref, rtol=1e-5, atol=1e-5), (loss, ref)

    # 2) partial (ragged) masks -- exercises the masked-mean / masked-max path
    mask_pos = jnp.array([[1, 1, 1, 1, 1, 1, 0, 0],
                          [1, 1, 1, 0, 0, 0, 0, 0]], jnp.float32)
    mask_neg = jnp.array([[1, 1, 1, 1, 0, 0, 0, 0],
                          [1, 1, 1, 1, 1, 1, 1, 0]], jnp.float32)
    loss_m = soft_nearest_neighbours_loss(anchor, positives, negatives,
                                          mask_pos=mask_pos, mask_neg=mask_neg,
                                          temperature=temperature)
    jax.block_until_ready(loss_m)
    ref_m = _reference_loss(anchor, positives, negatives,
                            mask_pos=mask_pos, mask_neg=mask_neg, T=temperature)
    assert jnp.allclose(loss_m, ref_m, rtol=1e-5, atol=1e-5), (loss_m, ref_m)

    # 3) unaligned batch + multi-step grid + non-(8,128)-aligned item counts
    B3, P3, N3, D3 = 19, 5, 7, 64
    anchor3 = jax.random.normal(k4, (B3, D3), jnp.float32) * 0.1
    positives3 = jax.random.normal(k5, (B3, P3, D3), jnp.float32) * 0.1
    negatives3 = jax.random.normal(k6, (B3, N3, D3), jnp.float32) * 0.1
    loss3 = soft_nearest_neighbours_loss(anchor3, positives3, negatives3,
                                         temperature=0.5)
    jax.block_until_ready(loss3)
    ref3 = _reference_loss(anchor3, positives3, negatives3, T=0.5)
    assert jnp.allclose(loss3, ref3, rtol=1e-5, atol=1e-5), (loss3, ref3)

    print("KERNEL_OK")
</pallas_src>

<mosaic_0001>
module attributes {stable_mosaic.version = 11 : i64} {
  func.func @kernel(%arg0: i32, %arg1: memref<8x32xf32, #tpu.memory_space<vmem>>, %arg2: memref<8x8x32xf32, #tpu.memory_space<vmem>>, %arg3: memref<8x8x32xf32, #tpu.memory_space<vmem>>, %arg4: memref<8x8xf32, #tpu.memory_space<vmem>>, %arg5: memref<8x8xf32, #tpu.memory_space<vmem>>, %arg6: memref<8x1xf32, #tpu.memory_space<vmem>>) attributes {dimension_semantics = [#tpu.dimension_semantics<parallel>], iteration_bounds = array<i64: 1>, scalar_prefetch = 0 : i64, scratch_operands = 0 : i64, tpu.core_type = #tpu.core_type<tc>, window_params = [{transform_indices = @transform_0, window_bounds = array<i64: 8, 32>}, {transform_indices = @transform_1, window_bounds = array<i64: 8, 8, 32>}, {transform_indices = @transform_2, window_bounds = array<i64: 8, 8, 32>}, {transform_indices = @transform_3, window_bounds = array<i64: 8, 8>}, {transform_indices = @transform_4, window_bounds = array<i64: 8, 8>}, {transform_indices = @transform_5, window_bounds = array<i64: 8, 1>}]} {
    %cst = arith.constant -1.000000e+30 : f32
    %c0_i32 = arith.constant 0 : i32
    %c8_i32 = arith.constant 8 : i32
    %0 = arith.muli %c0_i32, %c8_i32 : i32
    %1 = tpu.assume_multiple %0, 8 : i32
    %2 = arith.index_cast %1 : i32 to index
    %c0 = arith.constant 0 : index
    %3 = vector.load %arg1[%2, %c0] : memref<8x32xf32, #tpu.memory_space<vmem>>, vector<8x32xf32>
    %4 = arith.index_cast %1 : i32 to index
    %c0_0 = arith.constant 0 : index
    %c0_1 = arith.constant 0 : index
    %5 = vector.load %arg2[%4, %c0_0, %c0_1] : memref<8x8x32xf32, #tpu.memory_space<vmem>>, vector<8x8x32xf32>
    %6 = arith.index_cast %1 : i32 to index
    %c0_2 = arith.constant 0 : index
    %c0_3 = arith.constant 0 : index
    %7 = vector.load %arg3[%6, %c0_2, %c0_3] : memref<8x8x32xf32, #tpu.memory_space<vmem>>, vector<8x8x32xf32>
    %8 = arith.index_cast %1 : i32 to index
    %c0_4 = arith.constant 0 : index
    %9 = vector.load %arg4[%8, %c0_4] : memref<8x8xf32, #tpu.memory_space<vmem>>, vector<8x8xf32>
    %10 = arith.index_cast %1 : i32 to index
    %c0_5 = arith.constant 0 : index
    %11 = vector.load %arg5[%10, %c0_5] : memref<8x8xf32, #tpu.memory_space<vmem>>, vector<8x8xf32>
    %12 = vector.shape_cast %3 : vector<8x32xf32> to vector<8x1x32xf32>
    %13 = vector.broadcast %12 : vector<8x1x32xf32> to vector<8x8x32xf32>
    %14 = arith.mulf %13, %5 : vector<8x8x32xf32>
    %cst_6 = arith.constant dense<0.000000e+00> : vector<8x8xf32>
    %15 = vector.multi_reduction <add>, %14, %cst_6 [2] : vector<8x8x32xf32> to vector<8x8xf32>
    %16 = vector.shape_cast %3 : vector<8x32xf32> to vector<8x1x32xf32>
    %17 = vector.broadcast %16 : vector<8x1x32xf32> to vector<8x8x32xf32>
    %18 = arith.mulf %17, %7 : vector<8x8x32xf32>
    %cst_7 = arith.constant dense<0.000000e+00> : vector<8x8xf32>
    %19 = vector.multi_reduction <add>, %18, %cst_7 [2] : vector<8x8x32xf32> to vector<8x8xf32>
    %cst_8 = arith.constant 0.000000e+00 : f32
    %20 = vector.broadcast %cst_8 : f32 to vector<8x8xf32>
    %21 = arith.cmpf ogt, %9, %20 : vector<8x8xf32>
    %22 = vector.broadcast %cst : f32 to vector<8x8xf32>
    %23 = arith.select %21, %15, %22 : vector<8x8xi1>, vector<8x8xf32>
    %cst_9 = arith.constant 0.000000e+00 : f32
    %24 = vector.broadcast %cst_9 : f32 to vector<8x8xf32>
    %25 = arith.cmpf ogt, %11, %24 : vector<8x8xf32>
    %26 = vector.broadcast %cst : f32 to vector<8x8xf32>
    %27 = arith.select %25, %19, %26 : vector<8x8xi1>, vector<8x8xf32>
    %cst_10 = arith.constant dense<0xFF800000> : vector<8xf32>
    %28 = vector.multi_reduction <maximumf>, %23, %cst_10 [1] : vector<8x8xf32> to vector<8xf32>
    %29 = vector.shape_cast %28 : vector<8xf32> to vector<8x1xf32>
    %cst_11 = arith.constant dense<0xFF800000> : vector<8xf32>
    %30 = vector.multi_reduction <maximumf>, %27, %cst_11 [1] : vector<8x8xf32> to vector<8xf32>
    %31 = vector.shape_cast %30 : vector<8xf32> to vector<8x1xf32>
    %32 = arith.maximumf %29, %31 : vector<8x1xf32>
    %33 = vector.broadcast %32 : vector<8x1xf32> to vector<8x8xf32>
    %34 = arith.subf %23, %33 : vector<8x8xf32>
    %35 = math.exp %34 : vector<8x8xf32>
    %36 = arith.mulf %35, %9 : vector<8x8xf32>
    %cst_12 = arith.constant dense<0.000000e+00> : vector<8xf32>
    %37 = vector.multi_reduction <add>, %36, %cst_12 [1] : vector<8x8xf32> to vector<8xf32>
    %38 = vector.shape_cast %37 : vector<8xf32> to vector<8x1xf32>
    %39 = vector.broadcast %32 : vector<8x1xf32> to vector<8x8xf32>
    %40 = arith.subf %27, %39 : vector<8x8xf32>
    %41 = math.exp %40 : vector<8x8xf32>
    %42 = arith.mulf %41, %11 : vector<8x8xf32>
    %cst_13 = arith.constant dense<0.000000e+00> : vector<8xf32>
    %43 = vector.multi_reduction <add>, %42, %cst_13 [1] : vector<8x8xf32> to vector<8xf32>
    %44 = vector.shape_cast %43 : vector<8xf32> to vector<8x1xf32>
    %cst_14 = arith.constant dense<0.000000e+00> : vector<8xf32>
    %45 = vector.multi_reduction <add>, %9, %cst_14 [1] : vector<8x8xf32> to vector<8xf32>
    %46 = vector.shape_cast %45 : vector<8xf32> to vector<8x1xf32>
    %cst_15 = arith.constant dense<0.000000e+00> : vector<8xf32>
    %47 = vector.multi_reduction <add>, %11, %cst_15 [1] : vector<8x8xf32> to vector<8xf32>
    %48 = vector.shape_cast %47 : vector<8xf32> to vector<8x1xf32>
    %cst_16 = arith.constant 0.000000e+00 : f32
    %49 = vector.broadcast %cst_16 : f32 to vector<8x1xf32>
    %50 = arith.cmpf ogt, %46, %49 : vector<8x1xf32>
    %cst_17 = arith.constant 1.000000e+00 : f32
    %51 = vector.broadcast %cst_17 : f32 to vector<8x1xf32>
    %52 = arith.select %50, %46, %51 : vector<8x1xi1>, vector<8x1xf32>
    %53 = arith.divf %38, %52 : vector<8x1xf32>
    %cst_18 = arith.constant 0.000000e+00 : f32
    %54 = vector.broadcast %cst_18 : f32 to vector<8x1xf32>
    %55 = arith.cmpf ogt, %48, %54 : vector<8x1xf32>
    %cst_19 = arith.constant 1.000000e+00 : f32
    %56 = vector.broadcast %cst_19 : f32 to vector<8x1xf32>
    %57 = arith.select %55, %48, %56 : vector<8x1xi1>, vector<8x1xf32>
    %58 = arith.divf %44, %57 : vector<8x1xf32>
    %59 = arith.addf %53, %58 : vector<8x1xf32>
    %60 = arith.divf %53, %59 : vector<8x1xf32>
    %61 = math.log %60 : vector<8x1xf32>
    %cst_20 = arith.constant 0.000000e+00 : f32
    %62 = vector.broadcast %cst_20 : f32 to vector<8x1xf32>
    %63 = arith.subf %62, %61 : vector<8x1xf32>
    %c8_i32_21 = arith.constant 8 : i32
    %64 = arith.muli %arg0, %c8_i32_21 : i32
    %65 = arith.addi %64, %1 : i32
    %66 = tpu.iota {dimensions = array<i32: 0>} : vector<8x1xi32>
    %67 = vector.broadcast %65 : i32 to vector<8x1xi32>
    %68 = arith.addi %67, %66 : vector<8x1xi32>
    %c2_i32 = arith.constant 2 : i32
    %69 = vector.broadcast %c2_i32 : i32 to vector<8x1xi32>
    %70 = arith.cmpi slt, %68, %69 : vector<8x1xi32>
    %cst_22 = arith.constant 0.000000e+00 : f32
    %71 = vector.broadcast %cst_22 : f32 to vector<8x1xf32>
    %72 = arith.select %70, %63, %71 : vector<8x1xi1>, vector<8x1xf32>
    %73 = arith.index_cast %1 : i32 to index
    %c0_23 = arith.constant 0 : index
    %74 = vector.load %arg6[%73, %c0_23] : memref<8x1xf32, #tpu.memory_space<vmem>>, vector<8x1xf32>
    tpu.vector_store %arg6[%73, %c0_23], %72 {strides = array<i32>} : memref<8x1xf32, #tpu.memory_space<vmem>>, vector<8x1xf32>,
    %c1_i32 = arith.constant 1 : i32
    return
  }
  func.func @transform_0(%arg0: i32) -> (i32, i32) {
    %c0_i32 = arith.constant 0 : i32
    %c0_i32_0 = arith.constant 0 : i32
    return %arg0, %c0_i32 : i32, i32
  }
  func.func @transform_1(%arg0: i32) -> (i32, i32, i32) {
    %c0_i32 = arith.constant 0 : i32
    %c0_i32_0 = arith.constant 0 : i32
    %c0_i32_1 = arith.constant 0 : i32
    return %arg0, %c0_i32, %c0_i32_0 : i32, i32, i32
  }
  func.func @transform_2(%arg0: i32) -> (i32, i32, i32) {
    %c0_i32 = arith.constant 0 : i32
    %c0_i32_0 = arith.constant 0 : i32
    %c0_i32_1 = arith.constant 0 : i32
    return %arg0, %c0_i32, %c0_i32_0 : i32, i32, i32
  }
  func.func @transform_3(%arg0: i32) -> (i32, i32) {
    %c0_i32 = arith.constant 0 : i32
    %c0_i32_0 = arith.constant 0 : i32
    return %arg0, %c0_i32 : i32, i32
  }
  func.func @transform_4(%arg0: i32) -> (i32, i32) {
    %c0_i32 = arith.constant 0 : i32
    %c0_i32_0 = arith.constant 0 : i32
    return %arg0, %c0_i32 : i32, i32
  }
  func.func @transform_5(%arg0: i32) -> (i32, i32) {
    %c0_i32 = arith.constant 0 : i32
    %c0_i32_0 = arith.constant 0 : i32
    return %arg0, %c0_i32 : i32, i32
  }
}

</mosaic_0001>

<llo_original>
// kernel: tpu_custom_call.1
$region0: #{tpu_custom_call.1}
  #allocation0 [shape = 'u32[]', space=smem, size = 0x4, offset = 0x4, fixed_abs, tag = 'smem constant byte address 0x4 - core index']
  #allocation1 [shape = 'u32[144,128]{1,0:T(1,128)}', space=vmem, size = 0x12000, scoped, tag = 'internal scratch']
  %s0 = inlined_call_operand.hbm [shape: f32[8,32], index: 0, kind: input, shape index: {}]
  %s1 = inlined_call_operand.hbm [shape: f32[8,8,32], index: 1, kind: input, shape index: {}]
  %s2 = inlined_call_operand.hbm [shape: f32[8,8,32], index: 2, kind: input, shape index: {}]
  %s3 = inlined_call_operand.vmem [shape: f32[8,8], index: 3, kind: input, shape index: {}]
  %s4 = inlined_call_operand.hbm [shape: f32[8,8], index: 4, kind: input, shape index: {}]
  %s5 = inlined_call_operand.vmem [shape: f32[8,1], index: 5, kind: output, shape index: {}]
  %s6 = sld [smem:[#allocation0]]
  $region46: #{tpu_custom_call.1} parent=0
    _
  %s8 = ssub.s32 1, %s6
  %s9 = scalar_select 0, %s8, %s6
  $region1: #{tpu_custom_call.1} parent=0
    #allocation2 [shape = 'u8[4096]{0}', space=vmem, size = 0x1000, scoped, tag = 'input window, operand 0, single buffered']
    #allocation3 [shape = 's32[1]{0}', space=sflag, size = 0x4, scoped, tag = 'scoped memory for tpu_custom_call.1']
    #allocation4 [shape = 'u8[32768]{0}', space=vmem, size = 0x8000, scoped, tag = 'input window, operand 1, single buffered']
    #allocation5 [shape = 's32[1]{0}', space=sflag, size = 0x4, scoped, tag = 'scoped memory for tpu_custom_call.1']
    #allocation6 [shape = 'u8[32768]{0}', space=vmem, size = 0x8000, scoped, tag = 'input window, operand 2, single buffered']
    #allocation7 [shape = 'u8[4096]{0}', space=vmem, size = 0x1000, scoped, tag = 'input window, operand 4, single buffered']
    #allocation8 [shape = 's32[1]{0}', space=sflag, size = 0x4, scoped, tag = 'scoped memory for tpu_custom_call.1']
    %10 = vsyncpa [#allocation3], 0
    %11 = vsyncpa [#allocation5], 0
    %12 = vsyncpa [#allocation8], 0
    // Predicated region
    $region2: #{tpu_custom_call.1} parent=1 // pred_check
      _
    $region3: #{tpu_custom_call.1} parent=1 // pred_check_branch
      %14 = sbr.rel (0) target = $region5
    $region4: #{tpu_custom_call.1} parent=1 // pred_region
      %s16 = ssub.s32 128, 128
      %17 = vsyncadd [#allocation3], %s16
      %s19 = sshll.u32 [#allocation2], 4
      %s20 = int_to_ptr.vmem [resolvable:$true] %s19
      %22 = dma.hbm_to_vmem [thread:$0]  %s0, 128, %s20, [#allocation3]
    $region5: #{tpu_custom_call.1} parent=1 // pred_fallthru
      _
    // Predicated region
    $region6: #{tpu_custom_call.1} parent=1 // pred_check
      _
    $region7: #{tpu_custom_call.1} parent=1 // pred_check_branch
      %24 = sbr.rel (0) target = $region9
    $region8: #{tpu_custom_call.1} parent=1 // pred_region
      %s26 = ssub.s32 1024, 1024
      %27 = vsyncadd [#allocation5], %s26
      %s28 = sshll.u32 [#allocation4], 4
      %s29 = int_to_ptr.vmem [resolvable:$true] %s28
      %34 = dma.hbm_to_vmem [thread:$0]  %s1, 1024, %s29, [#allocation5], 128, 128, 8
    $region9: #{tpu_custom_call.1} parent=1 // pred_fallthru
      _
    // Predicated region
    $region10: #{tpu_custom_call.1} parent=1 // pred_check
      _
    $region11: #{tpu_custom_call.1} parent=1 // pred_check_branch
      %36 = sbr.rel (0) target = $region13
    $region12: #{tpu_custom_call.1} parent=1 // pred_region
      %s38 = ssub.s32 1024, 1024
      %39 = vsyncadd [#allocation5], %s38
      %s40 = sshll.u32 [#allocation6], 4
      %s41 = int_to_ptr.vmem [resolvable:$true] %s40
      %46 = dma.hbm_to_vmem [thread:$0]  %s2, 1024, %s41, [#allocation5], 128, 128, 8
    $region13: #{tpu_custom_call.1} parent=1 // pred_fallthru
      _
    // Predicated region
    $region14: #{tpu_custom_call.1} parent=1 // pred_check
      _
    $region15: #{tpu_custom_call.1} parent=1 // pred_check_branch
      %48 = sbr.rel (0) target = $region17
    $region16: #{tpu_custom_call.1} parent=1 // pred_region
      _
    $region17: #{tpu_custom_call.1} parent=1 // pred_fallthru
      _
    // Predicated region
    $region18: #{tpu_custom_call.1} parent=1 // pred_check
      _
    $region19: #{tpu_custom_call.1} parent=1 // pred_check_branch
      %50 = sbr.rel (0) target = $region21
    $region20: #{tpu_custom_call.1} parent=1 // pred_region
      %s52 = ssub.s32 128, 128
      %53 = vsyncadd [#allocation8], %s52
      %s55 = sshll.u32 [#allocation7], 4
      %s56 = int_to_ptr.vmem [resolvable:$true] %s55
      %58 = dma.hbm_to_vmem [thread:$0]  %s4, 128, %s56, [#allocation8]
    $region21: #{tpu_custom_call.1} parent=1 // pred_fallthru
      _
    // Predicated region
    $region22: #{tpu_custom_call.1} parent=1 // pred_check
      _
    $region23: #{tpu_custom_call.1} parent=1 // pred_check_branch
      %60 = sbr.rel (0) target = $region25
    $region24: #{tpu_custom_call.1} parent=1 // pred_region
      %61 = dma.done [#allocation3], 128
    $region25: #{tpu_custom_call.1} parent=1 // pred_fallthru
      _
    // Predicated region
    $region26: #{tpu_custom_call.1} parent=1 // pred_check
      _
    $region27: #{tpu_custom_call.1} parent=1 // pred_check_branch
      %63 = sbr.rel (0) target = $region29
    $region28: #{tpu_custom_call.1} parent=1 // pred_region
      %64 = dma.done [#allocation5], 1024
    $region29: #{tpu_custom_call.1} parent=1 // pred_fallthru
      _
    // Predicated region
    $region30: #{tpu_custom_call.1} parent=1 // pred_check
      _
    $region31: #{tpu_custom_call.1} parent=1 // pred_check_branch
      %66 = sbr.rel (0) target = $region33
    $region32: #{tpu_custom_call.1} parent=1 // pred_region
      %67 = dma.done [#allocation5], 1024
    $region33: #{tpu_custom_call.1} parent=1 // pred_fallthru
      _
    // Predicated region
    $region34: #{tpu_custom_call.1} parent=1 // pred_check
      _
    $region35: #{tpu_custom_call.1} parent=1 // pred_check_branch
      %69 = sbr.rel (0) target = $region37
    $region36: #{tpu_custom_call.1} parent=1 // pred_region
      %70 = dma.done [#allocation8], 128
    $region37: #{tpu_custom_call.1} parent=1 // pred_fallthru
      _
    %v71 = vld [vmem:[#allocation2] sm:$0xff]
    %s72 = smul.u32 0, 8
    %s73 = scalar_lea.vmem [#allocation4], %s72
    %v74 = vld [vmem:[%s73] sm:$0xff]
    %v75 = vld [vmem:[%s73 + $0x8] sm:$0xff]
    %v76 = vld [vmem:[%s73 + $0x10] sm:$0xff]
    %v77 = vld [vmem:[%s73 + $0x18] sm:$0xff]
    %v78 = vld [vmem:[%s73 + $0x20] sm:$0xff]
    %v79 = vld [vmem:[%s73 + $0x28] sm:$0xff]
    %v80 = vld [vmem:[%s73 + $0x30] sm:$0xff]
    %v81 = vld [vmem:[%s73 + $0x38] sm:$0xff]
    %s82 = scalar_lea.vmem [#allocation6], %s72
    %v83 = vld [vmem:[%s82] sm:$0xff]
    %v84 = vld [vmem:[%s82 + $0x8] sm:$0xff]
    %v85 = vld [vmem:[%s82 + $0x10] sm:$0xff]
    %v86 = vld [vmem:[%s82 + $0x18] sm:$0xff]
    %v87 = vld [vmem:[%s82 + $0x20] sm:$0xff]
    %v88 = vld [vmem:[%s82 + $0x28] sm:$0xff]
    %v89 = vld [vmem:[%s82 + $0x30] sm:$0xff]
    %v90 = vld [vmem:[%s82 + $0x38] sm:$0xff]
    %v91 = vld [vmem:[%s3] sm:$0xff]
    %v92 = vld [vmem:[#allocation7] sm:$0xff]
    %v94 = vcombine.high %v71, %v71
    %v96 = vunpack.c.l.s4 1966171168
    %v97 = vunpack.c.0.s8 %v96
    %v98 = vlaneseq
    %v99 = vshrl.u32 %v98, 7
    %v100 = vsub.s32 %v97, %v99
    %v101 = vrot.slane %v71, %v100
    %v103 = vunpack.c.l.s4 1966171168
    %v104 = vunpack.c.0.s8 %v103
    %v105 = vlaneseq
    %v106 = vshrl.u32 %v105, 7
    %v107 = vsub.s32 %v104, %v106
    %v108 = vrot.slane %v94, %v107
    %v109 = vcombine.high %v101, %v101
    %v110 = vcombine.high %v108, %v108
    %v112 = vunpack.c.l.s4 1966171168
    %v113 = vunpack.c.0.s8 %v112
    %v114 = vlaneseq
    %v115 = vshrl.u32 %v114, 7
    %v116 = vsub.s32 %v113, %v115
    %v117 = vrot.slane %v101, %v116
    %v119 = vunpack.c.l.s4 1966171168
    %v120 = vunpack.c.0.s8 %v119
    %v121 = vlaneseq
    %v122 = vshrl.u32 %v121, 7
    %v123 = vsub.s32 %v120, %v122
    %v124 = vrot.slane %v108, %v123
    %v126 = vunpack.c.l.s4 1966171168
    %v127 = vunpack.c.0.s8 %v126
    %v128 = vlaneseq
    %v129 = vshrl.u32 %v128, 7
    %v130 = vsub.s32 %v127, %v129
    %v131 = vrot.slane %v109, %v130
    %v133 = vunpack.c.l.s4 1966171168
    %v134 = vunpack.c.0.s8 %v133
    %v135 = vlaneseq
    %v136 = vshrl.u32 %v135, 7
    %v137 = vsub.s32 %v134, %v136
    %v138 = vrot.slane %v110, %v137
    %v139 = vcombine.high %v117, %v117
    %v140 = vcombine.high %v124, %v124
    %v141 = vcombine.high %v131, %v131
    %v142 = vcombine.high %v138, %v138
    %v143 = vlaneseq
    %v144 = vshrl.u32 %v143, 7
    %v145 = vsub.s32 0, %v144
    %v146 = vrot.slane %v117, %v145
    %v147 = vlaneseq
    %v148 = vshrl.u32 %v147, 7
    %v149 = vsub.s32 0, %v148
    %v150 = vrot.slane %v131, %v149
    %v151 = vlaneseq
    %v152 = vshrl.u32 %v151, 7
    %v153 = vsub.s32 0, %v152
    %v154 = vrot.slane %v139, %v153
    %v155 = vlaneseq
    %v156 = vshrl.u32 %v155, 7
    %v157 = vsub.s32 0, %v156
    %v158 = vrot.slane %v141, %v157
    %v159 = vlaneseq
    %v160 = vshrl.u32 %v159, 7
    %v161 = vsub.s32 0, %v160
    %v162 = vrot.slane %v124, %v161
    %v163 = vlaneseq
    %v164 = vshrl.u32 %v163, 7
    %v165 = vsub.s32 0, %v164
    %v166 = vrot.slane %v138, %v165
    %v167 = vlaneseq
    %v168 = vshrl.u32 %v167, 7
    %v169 = vsub.s32 0, %v168
    %v170 = vrot.slane %v140, %v169
    %v171 = vlaneseq
    %v172 = vshrl.u32 %v171, 7
    %v173 = vsub.s32 0, %v172
    %v174 = vrot.slane %v142, %v173
    %v183 = vmul.f32 %v146, %v74
    %v184 = vmul.f32 %v150, %v75
    %v185 = vmul.f32 %v154, %v76
    %v186 = vmul.f32 %v158, %v77
    %v187 = vmul.f32 %v162, %v78
    %v188 = vmul.f32 %v166, %v79
    %v189 = vmul.f32 %v170, %v80
    %v190 = vmul.f32 %v174, %v81
    %vm191 = vcmask 261120
    %v192 = vsel %vm191, %v183, 0.0
    %193 = vadd.xlane.f32.xlu0 %v192
    %v194 = vpop.xlane.xlu0 %193
    %v195 = vsel %vm191, %v184, 0.0
    %196 = vadd.xlane.f32.xlu0 %v195
    %v197 = vpop.xlane.xlu0 %196
    %v198 = vsel %vm191, %v185, 0.0
    %199 = vadd.xlane.f32.xlu0 %v198
    %v200 = vpop.xlane.xlu0 %199
    %v201 = vsel %vm191, %v186, 0.0
    %202 = vadd.xlane.f32.xlu0 %v201
    %v203 = vpop.xlane.xlu0 %202
    %v204 = vsel %vm191, %v187, 0.0
    %205 = vadd.xlane.f32.xlu0 %v204
    %v206 = vpop.xlane.xlu0 %205
    %v207 = vsel %vm191, %v188, 0.0
    %208 = vadd.xlane.f32.xlu0 %v207
    %v209 = vpop.xlane.xlu0 %208
    %v210 = vsel %vm191, %v189, 0.0
    %211 = vadd.xlane.f32.xlu0 %v210
    %v212 = vpop.xlane.xlu0 %211
    %v213 = vsel %vm191, %v190, 0.0
    %214 = vadd.xlane.f32.xlu0 %v213
    %v215 = vpop.xlane.xlu0 %214
    %v216 = vmul.f32 %v146, %v83
    %v217 = vmul.f32 %v150, %v84
    %v218 = vmul.f32 %v154, %v85
    %v219 = vmul.f32 %v158, %v86
    %v220 = vmul.f32 %v162, %v87
    %v221 = vmul.f32 %v166, %v88
    %v222 = vmul.f32 %v170, %v89
    %v223 = vmul.f32 %v174, %v90
    %v224 = vsel %vm191, %v216, 0.0
    %225 = vadd.xlane.f32.xlu0 %v224
    %v226 = vpop.xlane.xlu0 %225
    %v227 = vsel %vm191, %v217, 0.0
    %228 = vadd.xlane.f32.xlu0 %v227
    %v229 = vpop.xlane.xlu0 %228
    %v230 = vsel %vm191, %v218, 0.0
    %231 = vadd.xlane.f32.xlu0 %v230
    %v232 = vpop.xlane.xlu0 %231
    %v233 = vsel %vm191, %v219, 0.0
    %234 = vadd.xlane.f32.xlu0 %v233
    %v235 = vpop.xlane.xlu0 %234
    %v236 = vsel %vm191, %v220, 0.0
    %237 = vadd.xlane.f32.xlu0 %v236
    %v238 = vpop.xlane.xlu0 %237
    %v239 = vsel %vm191, %v221, 0.0
    %240 = vadd.xlane.f32.xlu0 %v239
    %v241 = vpop.xlane.xlu0 %240
    %v242 = vsel %vm191, %v222, 0.0
    %243 = vadd.xlane.f32.xlu0 %v242
    %v244 = vpop.xlane.xlu0 %243
    %v245 = vsel %vm191, %v223, 0.0
    %246 = vadd.xlane.f32.xlu0 %v245
    %v247 = vpop.xlane.xlu0 %246
    %vm248 = vcmp.gt.f32.partialorder %v91, 0.0
    %v257 = vlaneseq
    %v258 = vand.u32 %v257, 127
    %v259 = vlaneseq
    %v260 = vshrl.u32 %v259, 7
    %v261 = vsub.s32 %v258, %v260
    %v262 = vrot.slane %v194, %v261
    %v263 = vlaneseq
    %v264 = vshrl.u32 %v263, 7
    %v265 = vsub.s32 %v258, %v264
    %v266 = vrot.slane %v197, %v265
    %v267 = vlaneseq
    %v268 = vshrl.u32 %v267, 7
    %v269 = vsub.s32 %v258, %v268
    %v270 = vrot.slane %v200, %v269
    %v271 = vlaneseq
    %v272 = vshrl.u32 %v271, 7
    %v273 = vsub.s32 %v258, %v272
    %v274 = vrot.slane %v203, %v273
    %v275 = vlaneseq
    %v276 = vshrl.u32 %v275, 7
    %v277 = vsub.s32 %v258, %v276
    %v278 = vrot.slane %v206, %v277
    %v279 = vlaneseq
    %v280 = vshrl.u32 %v279, 7
    %v281 = vsub.s32 %v258, %v280
    %v282 = vrot.slane %v209, %v281
    %v283 = vlaneseq
    %v284 = vshrl.u32 %v283, 7
    %v285 = vsub.s32 %v258, %v284
    %v286 = vrot.slane %v212, %v285
    %v287 = vlaneseq
    %v288 = vshrl.u32 %v287, 7
    %v289 = vsub.s32 %v258, %v288
    %v290 = vrot.slane %v215, %v289
    %vm291 = vcmask 1041409
    %v292 = vsel %vm291, %v266, %v262
    %vm293 = vcmask 1042434
    %v294 = vsel %vm293, %v270, %v292
    %vm295 = vcmask 1043459
    %v296 = vsel %vm295, %v274, %v294
    %vm297 = vcmask 1044484
    %v298 = vsel %vm297, %v278, %v296
    %vm299 = vcmask 1045509
    %v300 = vsel %vm299, %v282, %v298
    %vm301 = vcmask 1046534
    %v302 = vsel %vm301, %v286, %v300
    %vm303 = vcmask 1047559
    %v304 = vsel %vm303, %v290, %v302
    %v306 = vsel %vm248, %v304, -1e+30
    %vm307 = vcmp.gt.f32.partialorder %v92, 0.0
    %v316 = vlaneseq
    %v317 = vshrl.u32 %v316, 7
    %v318 = vsub.s32 %v258, %v317
    %v319 = vrot.slane %v226, %v318
    %v320 = vlaneseq
    %v321 = vshrl.u32 %v320, 7
    %v322 = vsub.s32 %v258, %v321
    %v323 = vrot.slane %v229, %v322
    %v324 = vlaneseq
    %v325 = vshrl.u32 %v324, 7
    %v326 = vsub.s32 %v258, %v325
    %v327 = vrot.slane %v232, %v326
    %v328 = vlaneseq
    %v329 = vshrl.u32 %v328, 7
    %v330 = vsub.s32 %v258, %v329
    %v331 = vrot.slane %v235, %v330
    %v332 = vlaneseq
    %v333 = vshrl.u32 %v332, 7
    %v334 = vsub.s32 %v258, %v333
    %v335 = vrot.slane %v238, %v334
    %v336 = vlaneseq
    %v337 = vshrl.u32 %v336, 7
    %v338 = vsub.s32 %v258, %v337
    %v339 = vrot.slane %v241, %v338
    %v340 = vlaneseq
    %v341 = vshrl.u32 %v340, 7
    %v342 = vsub.s32 %v258, %v341
    %v343 = vrot.slane %v244, %v342
    %v344 = vlaneseq
    %v345 = vshrl.u32 %v344, 7
    %v346 = vsub.s32 %v258, %v345
    %v347 = vrot.slane %v247, %v346
    %v348 = vsel %vm291, %v323, %v319
    %v349 = vsel %vm293, %v327, %v348
    %v350 = vsel %vm295, %v331, %v349
    %v351 = vsel %vm297, %v335, %v350
    %v352 = vsel %vm299, %v339, %v351
    %v353 = vsel %vm301, %v343, %v352
    %v354 = vsel %vm303, %v347, %v353
    %v356 = vsel %vm307, %v354, -1e+30
    %vm357 = vcmask 64512
    %v358 = vsel %vm357, %v306, -inf
    %359 = vmax.xlane.f32.xlu0 %v358
    %v360 = vpop.xlane.xlu0 %359
    %v361 = vsel %vm357, %v356, -inf
    %362 = vmax.xlane.f32.xlu0 %v361
    %v363 = vpop.xlane.xlu0 %362
    %v364 = vmax.f32 %v360, %v363
    %v365 = vsub.f32 %v306, %v364
    %v366 = vmul.f32 %v365, 1.442695
    %v367 = vpow.pop %v366
    %v368 = vmul.f32 %v367, %v91
    %v369 = vsel %vm357, %v368, 0.0
    %370 = vadd.xlane.f32.xlu0 %v369
    %v371 = vpop.xlane.xlu0 %370
    %v372 = vsub.f32 %v356, %v364
    %v373 = vmul.f32 %v372, 1.442695
    %v374 = vpow.pop %v373
    %v375 = vmul.f32 %v374, %v92
    %v376 = vsel %vm357, %v375, 0.0
    %377 = vadd.xlane.f32.xlu0 %v376
    %v378 = vpop.xlane.xlu0 %377
    %v379 = vsel %vm357, %v91, 0.0
    %380 = vadd.xlane.f32.xlu0 %v379
    %v381 = vpop.xlane.xlu0 %380
    %v382 = vsel %vm357, %v92, 0.0
    %383 = vadd.xlane.f32.xlu0 %v382
    %v384 = vpop.xlane.xlu0 %383
    %vm385 = vcmp.gt.f32.partialorder %v381, 0.0
    %v386 = vsel %vm385, %v381, 1.0
    %v387 = vrcp.pop %v386
    %v388 = vmul.f32 %v371, %v387
    %vm389 = vcmp.gt.f32.partialorder %v384, 0.0
    %v390 = vsel %vm389, %v384, 1.0
    %v391 = vrcp.pop %v390
    %v392 = vmul.f32 %v378, %v391
    %v393 = vadd.f32 %v388, %v392
    %v394 = vrcp.pop %v393
    %v395 = vmul.f32 %v388, %v394
    %v396 = vlog2.pop %v395
    %v397 = vmul.f32 %v396, 0.6931472
    %v398 = vsub.f32 0.0, %v397
    %s399 = smul.u32 0, 8
    %s400 = sadd.s32 %s399, 0
    %v401 = vlaneseq
    %v402 = vshrl.u32 %v401, 7
    %v403 = vstv %s400
    %v404 = vadd.s32 %v403, %v402
    %vm405 = vcmp.lt.s32.totalorder %v404, 2
    %v406 = vsel %vm405, %v398, 0.0
    %vm407 = vcmask 7168
    %408 = vst.msk [vmem:[%s5] sm:$0xff] %vm407, %v406
    // Predicated region
    $region38: #{tpu_custom_call.1} parent=1 // pred_check
      _
    $region39: #{tpu_custom_call.1} parent=1 // pred_check_branch
      %410 = sbr.rel (0) target = $region41
    $region40: #{tpu_custom_call.1} parent=1 // pred_region
      _
    $region41: #{tpu_custom_call.1} parent=1 // pred_fallthru
      _
    // Predicated region
    $region42: #{tpu_custom_call.1} parent=1 // pred_check
      _
    $region43: #{tpu_custom_call.1} parent=1 // pred_check_branch
      %412 = sbr.rel (0) target = $region45
    $region44: #{tpu_custom_call.1} parent=1 // pred_region
      _
    $region45: #{tpu_custom_call.1} parent=1 // pred_fallthru
      _
    %413 = vsyncpa [#allocation3], 1
    %414 = vsyncpa [#allocation5], 1
    %415 = vsyncpa [#allocation8], 1

</llo_original>
